<compile_context>
chip_gen: v7x
topology: tpu7x:2x2x1
jax: 0.10.0
libtpu: 0.0.40
codegen_flags: <defaults>
</compile_context>

<pallas_src>
import functools

import jax
import jax.numpy as jnp
from jax import lax
from jax.experimental import pallas as pl
from jax.experimental.pallas import tpu as pltpu

NUM_CLASSES = 25
_LANE = 128
_SUBLANE = 8
_NEG_BIG = -1e30                      # "minus infinity" for padded class columns
_MAX_TILE_B = 2048                    # diminishing returns beyond ~1-2k rows/tile
_VMEM_FALLBACK = 64 * 1024 * 1024     # v7x per-TC capacity (safe lower bound)


def _round_up(x, m):
    return (x + m - 1) // m * m


def _vmem_budget_bytes():
    """~75% of this chip's VMEM: 48 MiB on v7x, 96 MiB on v5e/v6e."""
    try:
        cap = int(pltpu.get_tpu_info().vmem_capacity_bytes)
    except Exception:  # interpret mode / older jax / missing attribute
        cap = _VMEM_FALLBACK
    return max(16 * 1024 * 1024, (cap * 3) // 4)


def _pick_tile(B, H, c_pad, x_bytes, probs_bytes, budget, tile_b_hint):
    """Largest balanced batch tile whose double-buffered working set fits VMEM."""
    # Per-row bytes: x (2 bufs) + probs (2 bufs) + labels + f32 intermediates.
    per_row = 2 * H * x_bytes + 2 * c_pad * probs_bytes + 8 + H * 4 + c_pad * 8
    # Fixed bytes: resident weight/bias (still allocated as 2 buffers) + slack.
    fixed = 2 * H * c_pad * x_bytes + 2 * c_pad * 4 + 64 * 1024
    tile_from_vmem = max(_SUBLANE,
                         ((budget - fixed) // per_row) // _SUBLANE * _SUBLANE)

    cap = min(tile_from_vmem, _MAX_TILE_B, _round_up(B, _SUBLANE))
    if tile_b_hint is not None:
        cap = min(cap, max(_SUBLANE, _round_up(int(tile_b_hint), _SUBLANE)))
    if B >= 2 * _SUBLANE:
        # >=2 grid steps so both of v7x's TensorCores get work on the
        # "parallel" batch axis (one extra ~0.35us step is noise on 1-TC chips).
        cap = min(cap, _round_up(pl.cdiv(B, 2), _SUBLANE))
    cap = max(cap, _SUBLANE)

    num_tiles = pl.cdiv(B, cap)
    # Balanced tiles: minimize wasted rows in the last (partial) block.
    tile_b = min(cap, _round_up(pl.cdiv(B, num_tiles), _SUBLANE))
    if num_tiles == 1:
        tile_b = B  # single block == full array dim; no padding at all
    return tile_b


# --------------------------------------------------------------------------- #
# Kernels
# --------------------------------------------------------------------------- #
def _logp_tile(x_ref, w_ref, b_ref):
    """tanh -> linear -> log_softmax for one (tile_b, H) block. Returns f32."""
    # tanh in f32 (v5e has no bf16 VPU/EUP); cast back to storage dtype so a
    # bf16 pooler hits the bf16 MXU path. No-ops for f32 inputs.
    h = jnp.tanh(x_ref[...].astype(jnp.float32)).astype(x_ref.dtype)
    logits = jnp.dot(h, w_ref[...], preferred_element_type=jnp.float32)
    logits = logits + b_ref[...]  # padded class columns carry a -1e30 bias
    m = jnp.max(logits, axis=-1, keepdims=True)
    lse = m + jnp.log(jnp.sum(jnp.exp(logits - m), axis=-1, keepdims=True))
    return logits - lse


def _nll_tile_sum(logp, lbl_ref, batch, tile_b):
    """Per-tile sum of -logp[i, label[i]] over the valid (in-bounds) rows."""
    class_ids = lax.broadcasted_iota(jnp.int32, logp.shape, 1)
    picked = jnp.sum(jnp.where(class_ids == lbl_ref[...], logp, 0.0),
                     axis=-1, keepdims=True)                        # (tile_b, 1)
    row_ids = (pl.program_id(0) * tile_b
               + lax.broadcasted_iota(jnp.int32, picked.shape, 0))
    nll = jnp.where(row_ids < batch, -picked, 0.0)                   # mask tail rows
    return jnp.sum(nll)


def _kernel_probs(x_ref, w_ref, b_ref, probs_ref):
    probs_ref[...] = _logp_tile(x_ref, w_ref, b_ref).astype(probs_ref.dtype)


def _kernel_probs_loss(x_ref, w_ref, b_ref, lbl_ref, probs_ref, nll_ref, *,
                       batch, tile_b):
    logp = _logp_tile(x_ref, w_ref, b_ref)
    probs_ref[...] = logp.astype(probs_ref.dtype)
    s = _nll_tile_sum(logp, lbl_ref, batch, tile_b)
    nll_ref[...] = jnp.broadcast_to(s, nll_ref.shape).astype(jnp.float32)


def _kernel_loss_only(x_ref, w_ref, b_ref, lbl_ref, nll_ref, *, batch, tile_b):
    logp = _logp_tile(x_ref, w_ref, b_ref)
    s = _nll_tile_sum(logp, lbl_ref, batch, tile_b)
    nll_ref[...] = jnp.broadcast_to(s, nll_ref.shape).astype(jnp.float32)


# --------------------------------------------------------------------------- #
# Wrapper
# --------------------------------------------------------------------------- #
def custom_model_forward(pooler_output, weight, bias, label=None, tile_b=None,
                         return_probs=True):
    """Pallas equivalent of CustomModel.forward given the backbone's pooler_output.

    Args:
      pooler_output: [B, H] float array (f32 or bf16).
      weight:        [H, C] linear weight (C = 25).
      bias:          [C] or [1, C] linear bias.
      label:         optional [B] int class ids in [0, C).
      tile_b:        optional max rows per tile (auto-sized from VMEM if None).
      return_probs:  if False (and label given), run the loss-only kernel.

    Returns:
      (log_probs [B, C] in the pooler dtype or None, loss scalar or None)
    """
    B, H = pooler_output.shape
    C = weight.shape[1]
    x_dtype = pooler_output.dtype
    probs_dtype = x_dtype  # bf16 pooler -> bf16 log-probs (half the output bytes)
    c_pad = _round_up(C, _LANE)  # keep 128 even on 256-wide MXUs: kernel is HBM-bound

    budget = _vmem_budget_bytes()
    tb = _pick_tile(B, H, c_pad,
                    jnp.dtype(x_dtype).itemsize, jnp.dtype(probs_dtype).itemsize,
                    budget, tile_b)
    num_tiles = pl.cdiv(B, tb)

    # Head params: weight in the pooler dtype (tiny, resident, MXU-rate
    # friendly); bias f32 with -1e30 on padded class columns.
    w = jnp.pad(weight.astype(x_dtype), ((0, 0), (0, c_pad - C)))
    b = jnp.pad(jnp.reshape(bias, (1, C)).astype(jnp.float32),
                ((0, 0), (0, c_pad - C)), constant_values=_NEG_BIG)

    x_spec = pl.BlockSpec((tb, H), lambda i: (i, 0))
    w_spec = pl.BlockSpec((H, c_pad), lambda i: (0, 0))      # resident
    b_spec = pl.BlockSpec((1, c_pad), lambda i: (0, 0))      # resident
    probs_spec = pl.BlockSpec((tb, c_pad), lambda i: (i, 0))

    params = pltpu.CompilerParams(
        dimension_semantics=("parallel",),
        vmem_limit_bytes=int(budget),
    )

    if label is None:
        probs = pl.pallas_call(
            _kernel_probs,
            out_shape=jax.ShapeDtypeStruct((B, c_pad), probs_dtype),
            grid=(num_tiles,),
            in_specs=[x_spec, w_spec, b_spec],
            out_specs=probs_spec,
            compiler_params=params,
        )(pooler_output, w, b)
        return (probs[:, :C] if return_probs else None), None

    lbl = jnp.asarray(label, jnp.int32).reshape(B, 1)
    lbl_spec = pl.BlockSpec((tb, 1), lambda i: (i, 0))
    # Per-tile partial NLL sums written as dense (8,128) blocks (no lane-1
    # masked stores); the wrapper reduces num_tiles scalars.
    nll_shape = jax.ShapeDtypeStruct((num_tiles, _SUBLANE, _LANE), jnp.float32)
    nll_spec = pl.BlockSpec((1, _SUBLANE, _LANE), lambda i: (i, 0, 0))

    if return_probs:
        probs, nll = pl.pallas_call(
            functools.partial(_kernel_probs_loss, batch=B, tile_b=tb),
            out_shape=(jax.ShapeDtypeStruct((B, c_pad), probs_dtype), nll_shape),
            grid=(num_tiles,),
            in_specs=[x_spec, w_spec, b_spec, lbl_spec],
            out_specs=(probs_spec, nll_spec),
            compiler_params=params,
        )(pooler_output, w, b, lbl)
        loss = jnp.sum(nll[:, 0, 0]) / B   # mean over the TRUE batch
        return probs[:, :C], loss

    nll = pl.pallas_call(
        functools.partial(_kernel_loss_only, batch=B, tile_b=tb),
        out_shape=nll_shape,
        grid=(num_tiles,),
        in_specs=[x_spec, w_spec, b_spec, lbl_spec],
        out_specs=nll_spec,
        compiler_params=params,
    )(pooler_output, w, b, lbl)
    return None, jnp.sum(nll[:, 0, 0]) / B


def _reference(pooler_output, weight, bias, label=None):
    logits = (jnp.tanh(pooler_output.astype(jnp.float32)) @ weight
              + jnp.reshape(bias, (1, -1)))
    logp = jax.nn.log_softmax(logits, axis=-1)
    loss = None
    if label is not None:
        loss = -jnp.mean(jnp.take_along_axis(logp, label[:, None], axis=-1))
    return logp, loss


if __name__ == "__main__":
    key = jax.random.PRNGKey(0)
    k_x, k_w, k_b, k_y = jax.random.split(key, 4)

    B, H, C = 8, 32, NUM_CLASSES
    # Stand-in for `self.model(x).pooler_output`
    pooler = jax.random.normal(k_x, (B, H), dtype=jnp.float32)
    # Deterministic LazyLinear(25) parameters (materialized at in_features=H)
    weight = jax.random.normal(k_w, (H, C), dtype=jnp.float32) * 0.1
    bias = jax.random.normal(k_b, (1, C), dtype=jnp.float32) * 0.1
    label = jax.random.randint(k_y, (B,), 0, C, dtype=jnp.int32)

    probs, loss = custom_model_forward(pooler, weight, bias, label)
    probs = jax.block_until_ready(probs)
    loss = jax.block_until_ready(loss)

    ref_probs, ref_loss = _reference(pooler, weight, bias, label)
    assert probs.shape == (B, C)
    assert jnp.allclose(probs, ref_probs, atol=1e-5, rtol=1e-5)
    assert jnp.allclose(loss, ref_loss, atol=1e-5, rtol=1e-5)

    # label=None path (loss is None, like the PyTorch module).
    probs_only, no_loss = custom_model_forward(pooler, weight, bias, None)
    jax.block_until_ready(probs_only)
    assert no_loss is None
    assert jnp.allclose(probs_only, ref_probs, atol=1e-5, rtol=1e-5)

    # Loss-only training path (probs stream skipped entirely).
    no_probs, loss_only = custom_model_forward(pooler, weight, bias, label,
                                               return_probs=False)
    loss_only = jax.block_until_ready(loss_only)
    assert no_probs is None
    assert jnp.allclose(loss_only, ref_loss, atol=1e-5, rtol=1e-5)

    # Ragged batch (B not a multiple of the tile) with an explicit small tile:
    # exercises the no-pad partial-block path and a multi-tile parallel grid.
    B2 = 11
    pooler2 = jax.random.normal(k_x, (B2, H), dtype=jnp.float32)
    label2 = jax.random.randint(k_y, (B2,), 0, C, dtype=jnp.int32)
    probs2, loss2 = custom_model_forward(pooler2, weight, bias, label2, tile_b=8)
    probs2 = jax.block_until_ready(probs2)
    loss2 = jax.block_until_ready(loss2)
    ref_probs2, ref_loss2 = _reference(pooler2, weight, bias, label2)
    assert jnp.allclose(probs2, ref_probs2, atol=1e-5, rtol=1e-5)
    assert jnp.allclose(loss2, ref_loss2, atol=1e-5, rtol=1e-5)

    # Medium batch, fully automatic tiling (>=2 tiles, balanced, partial tail).
    B3 = 40
    pooler3 = jax.random.normal(k_x, (B3, H), dtype=jnp.float32)
    label3 = jax.random.randint(k_y, (B3,), 0, C, dtype=jnp.int32)
    probs3, loss3 = custom_model_forward(pooler3, weight, bias, label3)
    probs3 = jax.block_until_ready(probs3)
    loss3 = jax.block_until_ready(loss3)
    ref_probs3, ref_loss3 = _reference(pooler3, weight, bias, label3)
    assert jnp.allclose(probs3, ref_probs3, atol=1e-5, rtol=1e-5)
    assert jnp.allclose(loss3, ref_loss3, atol=1e-5, rtol=1e-5)

    # bf16 pooler smoke test (bandwidth-optimized path): bf16 DMA in, bf16 MXU
    # matmul, bf16 log-prob output (half the output bytes).
    probs_bf16, loss_bf16 = custom_model_forward(
        pooler.astype(jnp.bfloat16), weight, bias, label)
    probs_bf16 = jax.block_until_ready(probs_bf16)
    loss_bf16 = jax.block_until_ready(loss_bf16)
    assert probs_bf16.dtype == jnp.bfloat16
    assert bool(jnp.all(jnp.isfinite(probs_bf16.astype(jnp.float32))))
    assert bool(jnp.isfinite(loss_bf16))

    print("KERNEL_OK")
</pallas_src>

<mosaic_0001>
module attributes {stable_mosaic.version = 11 : i64} {
  func.func @_kernel_probs_loss(%arg0: i32, %arg1: memref<8x32xf32, #tpu.memory_space<vmem>>, %arg2: memref<32x128xf32, #tpu.memory_space<vmem>>, %arg3: memref<1x128xf32, #tpu.memory_space<vmem>>, %arg4: memref<8x1xi32, #tpu.memory_space<vmem>>, %arg5: memref<8x128xf32, #tpu.memory_space<vmem>>, %arg6: memref<1x8x128xf32, #tpu.memory_space<vmem>>) attributes {dimension_semantics = [#tpu.dimension_semantics<parallel>], iteration_bounds = array<i64: 1>, scalar_prefetch = 0 : i64, scratch_operands = 0 : i64, tpu.core_type = #tpu.core_type<tc>, window_params = [{transform_indices = @transform_0, window_bounds = array<i64: 8, 32>}, {pipeline_mode = #tpu.pipeline_mode<synchronous>, transform_indices = @transform_1, window_bounds = array<i64: 32, 128>}, {pipeline_mode = #tpu.pipeline_mode<synchronous>, transform_indices = @transform_2, window_bounds = array<i64: 1, 128>}, {transform_indices = @transform_3, window_bounds = array<i64: 8, 1>}, {transform_indices = @transform_4, window_bounds = array<i64: 8, 128>}, {transform_indices = @transform_5, window_bounds = array<i64: 1, 8, 128>}]} {
    %c0 = arith.constant 0 : index
    %c0_0 = arith.constant 0 : index
    %0 = vector.load %arg1[%c0, %c0_0] : memref<8x32xf32, #tpu.memory_space<vmem>>, vector<8x32xf32>
    %1 = math.tanh %0 : vector<8x32xf32>
    %c0_1 = arith.constant 0 : index
    %c0_2 = arith.constant 0 : index
    %2 = vector.load %arg2[%c0_1, %c0_2] : memref<32x128xf32, #tpu.memory_space<vmem>>, vector<32x128xf32>
    %cst = arith.constant dense<0.000000e+00> : vector<8x128xf32>
    %3 = tpu.matmul %1, %2, %cst {dimension_numbers = #tpu.dot_dimension_numbers<[1], [0], [0], [1], [0, 0, 1, 1], [], []>} : vector<8x32xf32>, vector<32x128xf32>, vector<8x128xf32> -> vector<8x128xf32>
    %c0_3 = arith.constant 0 : index
    %c0_4 = arith.constant 0 : index
    %4 = vector.load %arg3[%c0_3, %c0_4] : memref<1x128xf32, #tpu.memory_space<vmem>>, vector<1x128xf32>
    %5 = vector.broadcast %4 : vector<1x128xf32> to vector<8x128xf32>
    %6 = arith.addf %3, %5 : vector<8x128xf32>
    %cst_5 = arith.constant dense<0xFF800000> : vector<8xf32>
    %7 = vector.multi_reduction <maximumf>, %6, %cst_5 [1] : vector<8x128xf32> to vector<8xf32>
    %8 = vector.shape_cast %7 : vector<8xf32> to vector<8x1xf32>
    %9 = vector.broadcast %8 : vector<8x1xf32> to vector<8x128xf32>
    %10 = arith.subf %6, %9 : vector<8x128xf32>
    %11 = math.exp %10 : vector<8x128xf32>
    %cst_6 = arith.constant dense<0.000000e+00> : vector<8xf32>
    %12 = vector.multi_reduction <add>, %11, %cst_6 [1] : vector<8x128xf32> to vector<8xf32>
    %13 = vector.shape_cast %12 : vector<8xf32> to vector<8x1xf32>
    %14 = math.log %13 : vector<8x1xf32>
    %15 = arith.addf %8, %14 : vector<8x1xf32>
    %16 = vector.broadcast %15 : vector<8x1xf32> to vector<8x128xf32>
    %17 = arith.subf %6, %16 : vector<8x128xf32>
    %c0_7 = arith.constant 0 : index
    %c0_8 = arith.constant 0 : index
    %18 = vector.load %arg5[%c0_7, %c0_8] : memref<8x128xf32, #tpu.memory_space<vmem>>, vector<8x128xf32>
    tpu.vector_store %arg5[%c0_7, %c0_8], %17 {strides = array<i32>} : memref<8x128xf32, #tpu.memory_space<vmem>>, vector<8x128xf32>,
    %19 = tpu.iota {dimensions = array<i32: 1>} : vector<8x128xi32>
    %c0_9 = arith.constant 0 : index
    %c0_10 = arith.constant 0 : index
    %20 = vector.load %arg4[%c0_9, %c0_10] : memref<8x1xi32, #tpu.memory_space<vmem>>, vector<8x1xi32>
    %21 = vector.broadcast %20 : vector<8x1xi32> to vector<8x128xi32>
    %22 = arith.cmpi eq, %19, %21 : vector<8x128xi32>
    %cst_11 = arith.constant 0.000000e+00 : f32
    %23 = vector.broadcast %cst_11 : f32 to vector<8x128xf32>
    %24 = arith.select %22, %17, %23 : vector<8x128xi1>, vector<8x128xf32>
    %cst_12 = arith.constant dense<0.000000e+00> : vector<8xf32>
    %25 = vector.multi_reduction <add>, %24, %cst_12 [1] : vector<8x128xf32> to vector<8xf32>
    %26 = vector.shape_cast %25 : vector<8xf32> to vector<8x1xf32>
    %c8_i32 = arith.constant 8 : i32
    %27 = arith.muli %arg0, %c8_i32 : i32
    %28 = tpu.iota {dimensions = array<i32: 0>} : vector<8x1xi32>
    %29 = vector.broadcast %27 : i32 to vector<8x1xi32>
    %30 = arith.addi %29, %28 : vector<8x1xi32>
    %c8_i32_13 = arith.constant 8 : i32
    %31 = vector.broadcast %c8_i32_13 : i32 to vector<8x1xi32>
    %32 = arith.cmpi slt, %30, %31 : vector<8x1xi32>
    %cst_14 = arith.constant 0.000000e+00 : f32
    %33 = vector.broadcast %cst_14 : f32 to vector<8x1xf32>
    %34 = arith.subf %33, %26 : vector<8x1xf32>
    %cst_15 = arith.constant 0.000000e+00 : f32
    %35 = vector.broadcast %cst_15 : f32 to vector<8x1xf32>
    %36 = arith.select %32, %34, %35 : vector<8x1xi1>, vector<8x1xf32>
    %37 = vector.shape_cast %36 : vector<8x1xf32> to vector<1x8x1xf32>
    %cst_16 = arith.constant dense<0.000000e+00> : vector<1xf32>
    %38 = vector.multi_reduction <add>, %37, %cst_16 [1, 2] : vector<1x8x1xf32> to vector<1xf32>
    %39 = vector.shape_cast %38 : vector<1xf32> to vector<1x1x1xf32>
    %40 = vector.extract %39[0, 0, 0] : f32 from vector<1x1x1xf32>
    %41 = vector.broadcast %40 : f32 to vector<1x8x128xf32>
    %c0_17 = arith.constant 0 : index
    %c0_18 = arith.constant 0 : index
    %c0_19 = arith.constant 0 : index
    %42 = vector.load %arg6[%c0_17, %c0_18, %c0_19] : memref<1x8x128xf32, #tpu.memory_space<vmem>>, vector<1x8x128xf32>
    tpu.vector_store %arg6[%c0_17, %c0_18, %c0_19], %41 {strides = array<i32>} : memref<1x8x128xf32, #tpu.memory_space<vmem>>, vector<1x8x128xf32>,
    return
  }
  func.func @transform_0(%arg0: i32) -> (i32, i32) {
    %c0_i32 = arith.constant 0 : i32
    %c0_i32_0 = arith.constant 0 : i32
    return %arg0, %c0_i32 : i32, i32
  }
  func.func @transform_1(%arg0: i32) -> (i32, i32) {
    %c0_i32 = arith.constant 0 : i32
    %c0_i32_0 = arith.constant 0 : i32
    %c0_i32_1 = arith.constant 0 : i32
    return %c0_i32, %c0_i32_0 : i32, i32
  }
  func.func @transform_2(%arg0: i32) -> (i32, i32) {
    %c0_i32 = arith.constant 0 : i32
    %c0_i32_0 = arith.constant 0 : i32
    %c0_i32_1 = arith.constant 0 : i32
    return %c0_i32, %c0_i32_0 : i32, i32
  }
  func.func @transform_3(%arg0: i32) -> (i32, i32) {
    %c0_i32 = arith.constant 0 : i32
    %c0_i32_0 = arith.constant 0 : i32
    return %arg0, %c0_i32 : i32, i32
  }
  func.func @transform_4(%arg0: i32) -> (i32, i32) {
    %c0_i32 = arith.constant 0 : i32
    %c0_i32_0 = arith.constant 0 : i32
    return %arg0, %c0_i32 : i32, i32
  }
  func.func @transform_5(%arg0: i32) -> (i32, i32, i32) {
    %c0_i32 = arith.constant 0 : i32
    %c0_i32_0 = arith.constant 0 : i32
    %c0_i32_1 = arith.constant 0 : i32
    return %arg0, %c0_i32, %c0_i32_0 : i32, i32, i32
  }
}

</mosaic_0001>

<llo_original>
// kernel: tpu_custom_call.1
$region0: #{tpu_custom_call.1}
  #allocation0 [shape = 'u32[]', space=smem, size = 0x4, offset = 0x4, fixed_abs, tag = 'smem constant byte address 0x4 - core index']
  #allocation1 [shape = 'u32[144,128]{1,0:T(1,128)}', space=vmem, size = 0x12000, scoped, tag = 'internal scratch']
  %s0 = inlined_call_operand.vmem [shape: f32[8,32], index: 0, kind: input, shape index: {}]
  %s1 = inlined_call_operand.hbm [shape: f32[32,128], index: 1, kind: input, shape index: {}]
  %s2 = inlined_call_operand.vmem [shape: f32[1,128], index: 2, kind: input, shape index: {}]
  %s3 = inlined_call_operand.vmem [shape: s32[8,1], index: 3, kind: input, shape index: {}]
  %s4 = inlined_call_operand.hbm [shape: f32[8,128], index: 4, kind: output, shape index: {0}]
  %s5 = inlined_call_operand.hbm [shape: f32[1,8,128], index: 5, kind: output, shape index: {1}]
  %6 = xla_tuple %s4, %s5
  %s7 = sld [smem:[#allocation0]]
  $region38: #{tpu_custom_call.1} parent=0
    _
  %s9 = ssub.s32 1, %s7
  %s10 = scalar_select 0, %s9, %s7
  $region1: #{tpu_custom_call.1} parent=0
    #allocation2 [shape = 'u8[16384]{0}', space=vmem, size = 0x4000, scoped, tag = 'input window, operand 1, single buffered']
    #allocation3 [shape = 's32[1]{0}', space=sflag, size = 0x4, scoped, tag = 'scoped memory for tpu_custom_call.1']
    #allocation4 [shape = 's32[1]{0}', space=sflag, size = 0x4, scoped, tag = 'scoped memory for tpu_custom_call.1']
    #allocation5 [shape = 'u8[4096]{0}', space=vmem, size = 0x1000, scoped, tag = 'output window, operand 0, single buffered']
    #allocation6 [shape = 'u8[4096]{0}', space=vmem, size = 0x1000, scoped, tag = 'output window, operand 1, single buffered']
    #allocation7 [shape = 's32[1]{0}', space=sflag, size = 0x4, scoped, tag = 'scoped memory for tpu_custom_call.1']
    %11 = vsyncpa [#allocation3], 0
    %12 = vsyncpa [#allocation4], 0
    %13 = vsyncpa [#allocation7], 0
    // Predicated region
    $region2: #{tpu_custom_call.1} parent=1 // pred_check
      _
    $region3: #{tpu_custom_call.1} parent=1 // pred_check_branch
      %15 = sbr.rel (0) target = $region5
    $region4: #{tpu_custom_call.1} parent=1 // pred_region
      _
    $region5: #{tpu_custom_call.1} parent=1 // pred_fallthru
      _
    // Predicated region
    $region6: #{tpu_custom_call.1} parent=1 // pred_check
      _
    $region7: #{tpu_custom_call.1} parent=1 // pred_check_branch
      %17 = sbr.rel (0) target = $region9
    $region8: #{tpu_custom_call.1} parent=1 // pred_region
      %s19 = ssub.s32 512, 512
      %20 = vsyncadd [#allocation3], %s19
      %s21 = sshll.u32 [#allocation2], 4
      %s22 = int_to_ptr.vmem [resolvable:$true] %s21
      %27 = dma.hbm_to_vmem [thread:$0]  %s1, 512, %s22, [#allocation3], 128, 128, 8
    $region9: #{tpu_custom_call.1} parent=1 // pred_fallthru
      _
    // Predicated region
    $region10: #{tpu_custom_call.1} parent=1 // pred_check
      _
    $region11: #{tpu_custom_call.1} parent=1 // pred_check_branch
      %29 = sbr.rel (0) target = $region13
    $region12: #{tpu_custom_call.1} parent=1 // pred_region
      _
    $region13: #{tpu_custom_call.1} parent=1 // pred_fallthru
      _
    // Predicated region
    $region14: #{tpu_custom_call.1} parent=1 // pred_check
      _
    $region15: #{tpu_custom_call.1} parent=1 // pred_check_branch
      %31 = sbr.rel (0) target = $region17
    $region16: #{tpu_custom_call.1} parent=1 // pred_region
      _
    $region17: #{tpu_custom_call.1} parent=1 // pred_fallthru
      _
    // Predicated region
    $region18: #{tpu_custom_call.1} parent=1 // pred_check
      _
    $region19: #{tpu_custom_call.1} parent=1 // pred_check_branch
      %33 = sbr.rel (0) target = $region21
    $region20: #{tpu_custom_call.1} parent=1 // pred_region
      %34 = dma.done [#allocation3], 512
    $region21: #{tpu_custom_call.1} parent=1 // pred_fallthru
      _
    %v35 = vld [vmem:[%s0] sm:$0xff]
    %v36 = vtanh.pop %v35
    %v37 = vld [vmem:[#allocation2] sm:$0xff]
    %v38 = vld [vmem:[#allocation2 + $0x8] sm:$0xff]
    %v39 = vld [vmem:[#allocation2 + $0x10] sm:$0xff]
    %v40 = vld [vmem:[#allocation2 + $0x18] sm:$0xff]
    %v41 = vld [vmem:[%s2] sm:$0x1]
    %v43 = vlaneseq
    %v44 = vshrl.u32 %v43, 7
    %v45 = vsub.s32 0, %v44
    %v46 = vrot.slane %v41, %v45
    %vm48 = vcmask 261120
    %v50 = vsel %vm48, %v36, 0
    %52 = vmatprep.subr.mxu0 0.0
    %53 = vmatpush1.msra.mxu0 %v37
    %54 = vmatprep.subr.mxu0 0.0
    %55 = vmatpush1.msra.mxu0 %v38
    %56 = vmatprep.subr.mxu0 0.0
    %57 = vmatpush1.msra.mxu0 %v39
    %58 = vmatprep.subr.mxu0 0.0
    %59 = vmatpush1.msra.mxu0 %v40
    %60 = vmatprep.subr.mxu0 0.0
    %61 = vmatpush1.msra.mxu0 0.0
    %62 = vmatprep.subr.mxu0 0.0
    %63 = vmatpush1.msra.mxu0 0.0
    %64 = vmatprep.subr.mxu0 0.0
    %65 = vmatpush1.msra.mxu0 0.0
    %66 = vmatprep.subr.mxu0 0.0
    %67 = vmatpush1.msra.mxu0 0.0
    %68 = vmatprep.subr.mxu0 0.0
    %69 = vmatpush1.msra.mxu0 0.0
    %70 = vmatprep.subr.mxu0 0.0
    %71 = vmatpush1.msra.mxu0 0.0
    %72 = vmatprep.subr.mxu0 0.0
    %73 = vmatpush1.msra.mxu0 0.0
    %74 = vmatprep.subr.mxu0 0.0
    %75 = vmatpush1.msra.mxu0 0.0
    %76 = vmatprep.subr.mxu0 0.0
    %77 = vmatpush1.msra.mxu0 0.0
    %78 = vmatprep.subr.mxu0 0.0
    %79 = vmatpush1.msra.mxu0 0.0
    %80 = vmatprep.subr.mxu0 0.0
    %81 = vmatpush1.msra.mxu0 0.0
    %82 = vmatprep.subr.mxu0 0.0
    %83 = vmatpush1.msra.mxu0 0.0
    %84 = vmatprep.subr.mxu0 0.0
    %85 = vmatpush1.msra.mxu0 0.0
    %86 = vmatprep.subr.mxu0 0.0
    %87 = vmatpush1.msra.mxu0 0.0
    %88 = vmatprep.subr.mxu0 0.0
    %89 = vmatpush1.msra.mxu0 0.0
    %90 = vmatprep.subr.mxu0 0.0
    %91 = vmatpush1.msra.mxu0 0.0
    %92 = vmatprep.subr.mxu0 0.0
    %93 = vmatpush1.msra.mxu0 0.0
    %94 = vmatprep.subr.mxu0 0.0
    %95 = vmatpush1.msra.mxu0 0.0
    %96 = vmatprep.subr.mxu0 0.0
    %97 = vmatpush1.msra.mxu0 0.0
    %98 = vmatprep.subr.mxu0 0.0
    %99 = vmatpush1.msra.mxu0 0.0
    %100 = vmatprep.subr.mxu0 0.0
    %101 = vmatpush1.msra.mxu0 0.0
    %102 = vmatprep.subr.mxu0 0.0
    %103 = vmatpush1.msra.mxu0 0.0
    %104 = vmatprep.subr.mxu0 0.0
    %105 = vmatpush1.msra.mxu0 0.0
    %106 = vmatprep.subr.mxu0 0.0
    %107 = vmatpush1.msra.mxu0 0.0
    %108 = vmatprep.subr.mxu0 0.0
    %109 = vmatpush1.msra.mxu0 0.0
    %110 = vmatprep.subr.mxu0 0.0
    %111 = vmatpush1.msra.mxu0 0.0
    %112 = vmatprep.subr.mxu0 0.0
    %113 = vmatpush1.msra.mxu0 0.0
    %114 = vmatprep.subr.mxu0 0.0
    %115 = vmatpush1.msra.mxu0 0.0
    %116 = vmatprep.mubr.f32.mxu0 0.0
    %117 = vmatmul.mubr.f32.gmra.mrb[0].mxu0 %v50
    %v118 = vpop.f32.mrb[0].mxu0
    %v119 = vadd.f32 %v46, %v118
    %v120 = vpop.f32.mrb[0].mxu0
    %121 = vdwg.mxu0
    %122 = vmax.xlane.f32.xlu0 %v119
    %v123 = vpop.xlane.xlu0 %122
    %v124 = vsub.f32 %v119, %v123
    %v125 = vmul.f32 %v124, 1.442695
    %v126 = vpow.pop %v125
    %127 = vadd.xlane.f32.xlu0 %v126
    %v128 = vpop.xlane.xlu0 %127
    %v129 = vlog2.pop %v128
    %v130 = vmul.f32 %v129, 0.6931472
    %v131 = vadd.f32 %v123, %v130
    %v132 = vsub.f32 %v119, %v131
    %133 = vst [vmem:[#allocation5] sm:$0xff] %v132
    %v134 = vlaneseq
    %v135 = vand.u32 %v134, 127
    %v136 = vld [vmem:[%s3] sm:$0xff]
    %137 = vset.pattern.permute.xlu0 0
    %138 = vperm.xlu0 %137, %v136
    %v139 = vpop.permute.xlu0 %138
    %vm140 = vcmp.eq.s32.totalorder %v135, %v139
    %v141 = vsel %vm140, %v132, 0.0
    %142 = vadd.xlane.f32.xlu0 %v141
    %v143 = vpop.xlane.xlu0 %142
    %s144 = smul.u32 0, 8
    %v145 = vlaneseq
    %v146 = vshrl.u32 %v145, 7
    %v147 = vstv %s144
    %v148 = vadd.s32 %v147, %v146
    %vm149 = vcmp.lt.s32.totalorder %v148, 8
    %v150 = vsub.f32 0.0, %v143
    %v151 = vsel %vm149, %v150, 0.0
    %vm152 = vcmask 7168
    %v153 = vsel %vm152, %v151, 0.0
    %154 = vadd.xlane.f32.xlu0 %v153
    %v155 = vpop.xlane.xlu0 %154
    %v156 = vrot.slane %v155, 4
    %v157 = vadd.f32 %v155, %v156
    %v158 = vrot.slane %v157, 2
    %v159 = vadd.f32 %v157, %v158
    %v160 = vrot.slane %v159, 1
    %v161 = vadd.f32 %v159, %v160
    %s162 = vtos %v161
    %v163 = vstv %s162
    %164 = vst [vmem:[#allocation6] sm:$0xff] %v163
    // Predicated region
    $region22: #{tpu_custom_call.1} parent=1 // pred_check
      _
    $region23: #{tpu_custom_call.1} parent=1 // pred_check_branch
      %166 = sbr.rel (0) target = $region25
    $region24: #{tpu_custom_call.1} parent=1 // pred_region
      %s168 = ssub.s32 128, 128
      %169 = vsyncadd [#allocation4], %s168
      %s171 = sshll.u32 [#allocation5], 4
      %s172 = int_to_ptr.vmem [resolvable:$true] %s171
      %174 = dma.vmem_to_hbm [thread:$0]  %s172, 128, %s4, [#allocation4]
    $region25: #{tpu_custom_call.1} parent=1 // pred_fallthru
      _
    // Predicated region
    $region26: #{tpu_custom_call.1} parent=1 // pred_check
      _
    $region27: #{tpu_custom_call.1} parent=1 // pred_check_branch
      %176 = sbr.rel (0) target = $region29
    $region28: #{tpu_custom_call.1} parent=1 // pred_region
      %s178 = ssub.s32 128, 128
      %179 = vsyncadd [#allocation7], %s178
      %s181 = sshll.u32 [#allocation6], 4
      %s182 = int_to_ptr.vmem [resolvable:$true] %s181
      %184 = dma.vmem_to_hbm [thread:$0]  %s182, 128, %s5, [#allocation7]
    $region29: #{tpu_custom_call.1} parent=1 // pred_fallthru
      _
    // Predicated region
    $region30: #{tpu_custom_call.1} parent=1 // pred_check
      _
    $region31: #{tpu_custom_call.1} parent=1 // pred_check_branch
      %186 = sbr.rel (0) target = $region33
    $region32: #{tpu_custom_call.1} parent=1 // pred_region
      %187 = dma.done [#allocation4], 128
    $region33: #{tpu_custom_call.1} parent=1 // pred_fallthru
      _
    // Predicated region
    $region34: #{tpu_custom_call.1} parent=1 // pred_check
      _
    $region35: #{tpu_custom_call.1} parent=1 // pred_check_branch
      %189 = sbr.rel (0) target = $region37
    $region36: #{tpu_custom_call.1} parent=1 // pred_region
      %190 = dma.done [#allocation7], 128
    $region37: #{tpu_custom_call.1} parent=1 // pred_fallthru
      _
    %191 = vsyncpa [#allocation3], 1
    %192 = vsyncpa [#allocation4], 1
    %193 = vsyncpa [#allocation7], 1

</llo_original>
